<compile_context>
chip_gen: v7x
topology: tpu7x:2x2x1
jax: 0.10.0
libtpu: 0.0.40
codegen_flags: <defaults>
</compile_context>

<pallas_src>
import functools

import jax
import jax.numpy as jnp
from jax.experimental import pallas as pl
from jax.experimental.pallas import tpu as pltpu


# ---------------- fused single-pass kernel (tensor fits in VMEM) -------------

def _bn_fused_kernel(x_ref, g_ref, b_ref, o_ref, *, inv_count, eps):
    x = x_ref[...].astype(jnp.float32)                    # (R, C, HW)
    xs = jnp.sum(x, axis=0)                               # (C, HW)
    xss = jnp.sum(x * x, axis=0)                          # (C, HW)
    s = jnp.sum(xs, axis=1, keepdims=True)                # (C, 1)
    ss = jnp.sum(xss, axis=1, keepdims=True)              # (C, 1)
    mean = s * inv_count
    # Biased variance; clamp >= 0 to guard E[x^2]-mean^2 cancellation.
    var = jnp.maximum(ss * inv_count - mean * mean, 0.0)
    scale = g_ref[...] * jax.lax.rsqrt(var + eps)          # (C, 1)
    shift = b_ref[...] - mean * scale                      # (C, 1)
    o_ref[...] = (x * scale[None] + shift[None]).astype(o_ref.dtype)


# ---------------- pass 1 (large tensors): per-tile sum / sumsq ----------------

def _stats_kernel(x_ref, o_ref, *, rows_total, tile_rows):
    x = x_ref[...].astype(jnp.float32)                     # (tb, C, HW)
    if rows_total % tile_rows != 0:
        # Ragged last tile: zero out the out-of-bounds rows before reducing.
        start = pl.program_id(0) * tile_rows
        row_ids = jax.lax.broadcasted_iota(jnp.int32, x.shape, 0)
        x = jnp.where(start + row_ids < rows_total, x, 0.0)
    xs = jnp.sum(x, axis=0)                                # (C, HW)
    xss = jnp.sum(x * x, axis=0)                           # (C, HW)
    s = jnp.sum(xs, axis=1)                                # (C,)
    ss = jnp.sum(xss, axis=1)                              # (C,)
    o_ref[...] = jnp.concatenate([s[None, :], ss[None, :]], axis=0)[None]


# ---------------- pass 2 (large tensors): lane-dense normalize ----------------

def _normalize_kernel(x_ref, scale_ref, shift_ref, o_ref):
    x = x_ref[...].astype(jnp.float32)                     # (tb, C*HW)
    o_ref[...] = (x * scale_ref[...] + shift_ref[...]).astype(o_ref.dtype)


# ------------------------------- wrapper --------------------------------------

def batch_norm_2d1_forward(x, gamma, beta, *, eps=1e-5,
                           fuse_threshold_bytes=None,
                           tile_budget_bytes=None):
    """x: (T, N, C, H, W). gamma, beta: (C,). Returns (T, N, C, H, W)."""
    T, N, C, H, W = x.shape
    R, HW = T * N, H * W
    CHW = C * HW
    count = R * HW
    itemsize = jnp.dtype(x.dtype).itemsize
    total_bytes = R * CHW * itemsize

    # Per-generation budgets from the actual VMEM capacity (v5e/v6e: 128 MiB,
    # v7x: 64 MiB per TensorCore).  Conservative fallback if the query fails.
    try:
        vmem_cap = int(pltpu.get_tpu_info().vmem_capacity_bytes)
    except Exception:
        vmem_cap = 64 << 20
    vmem_limit = min(vmem_cap * 3 // 4, 100 << 20)          # 96 MiB / 48 MiB
    if fuse_threshold_bytes is None:
        fuse_threshold_bytes = vmem_cap // 10               # ~12.8 / 6.4 MiB
    if tile_budget_bytes is None:
        tile_budget_bytes = max(1 << 20, vmem_cap // 12)     # ~10.6 / 5.3 MiB

    x3 = x.reshape(R, C, HW)                                 # free merge

    # ---------------- fused single pass: 1 read + 1 write of HBM -------------
    if total_bytes <= fuse_threshold_bytes:
        g2 = gamma.reshape(C, 1).astype(jnp.float32)
        b2 = beta.reshape(C, 1).astype(jnp.float32)
        kern = functools.partial(_bn_fused_kernel,
                                 inv_count=float(1.0 / count), eps=float(eps))
        out3 = pl.pallas_call(
            kern,
            out_shape=jax.ShapeDtypeStruct((R, C, HW), x.dtype),
            grid=(1,),
            in_specs=[
                pl.BlockSpec((R, C, HW), lambda i: (0, 0, 0)),
                pl.BlockSpec((C, 1), lambda i: (0, 0)),
                pl.BlockSpec((C, 1), lambda i: (0, 0)),
            ],
            out_specs=pl.BlockSpec((R, C, HW), lambda i: (0, 0, 0)),
            compiler_params=pltpu.CompilerParams(
                dimension_semantics=("arbitrary",),
                vmem_limit_bytes=vmem_limit,
            ),
        )(x3, g2, b2)
        return out3.reshape(T, N, C, H, W)

    # ---------------- pass 1: per-tile partial (sum, sumsq) ------------------
    row_bytes = C * HW * itemsize
    tb1 = max(1, min(R, tile_budget_bytes // row_bytes))
    n_tiles1 = pl.cdiv(R, tb1)
    stats_kern = functools.partial(_stats_kernel, rows_total=R, tile_rows=tb1)
    partials = pl.pallas_call(
        stats_kern,
        out_shape=jax.ShapeDtypeStruct((n_tiles1, 2, C), jnp.float32),
        grid=(n_tiles1,),
        in_specs=[pl.BlockSpec((tb1, C, HW), lambda i: (i, 0, 0))],
        out_specs=pl.BlockSpec((1, 2, C), lambda i: (i, 0, 0)),
        compiler_params=pltpu.CompilerParams(
            dimension_semantics=("parallel",),
            vmem_limit_bytes=vmem_limit,
        ),
    )(x3)

    # Tiny finalize in plain JAX (C-length vectors).
    totals = jnp.sum(partials, axis=0)                       # (2, C)
    mean = totals[0] / count
    var = jnp.maximum(totals[1] / count - mean * mean, 0.0)  # biased, clamped
    scale_c = gamma.astype(jnp.float32) * jax.lax.rsqrt(var + eps)
    shift_c = beta.astype(jnp.float32) - mean * scale_c
    scale2 = jnp.broadcast_to(scale_c[:, None], (C, HW)).reshape(1, CHW)
    shift2 = jnp.broadcast_to(shift_c[:, None], (C, HW)).reshape(1, CHW)

    # ---------------- pass 2: lane-dense normalize ----------------------------
    x2 = x.reshape(R, CHW)                                    # free merge
    row_bytes2 = CHW * itemsize
    tb2 = max(8, (max(1, tile_budget_bytes // row_bytes2) // 8) * 8)
    if tb2 >= R:
        tb2 = R                                               # full extent OK
    n_tiles2 = pl.cdiv(R, tb2)
    out2 = pl.pallas_call(
        _normalize_kernel,
        out_shape=jax.ShapeDtypeStruct((R, CHW), x.dtype),
        grid=(n_tiles2,),
        in_specs=[
            pl.BlockSpec((tb2, CHW), lambda i: (i, 0)),
            pl.BlockSpec((1, CHW), lambda i: (0, 0)),   # resident across steps
            pl.BlockSpec((1, CHW), lambda i: (0, 0)),
        ],
        out_specs=pl.BlockSpec((tb2, CHW), lambda i: (i, 0)),
        compiler_params=pltpu.CompilerParams(
            dimension_semantics=("parallel",),
            vmem_limit_bytes=vmem_limit,
        ),
    )(x2, scale2, shift2)
    return out2.reshape(T, N, C, H, W)


# ------------------------------- reference ------------------------------------

def _reference(x, gamma, beta, eps=1e-5):
    mean = jnp.mean(x, axis=(0, 1, 3, 4), keepdims=True)
    var = jnp.mean((x - mean) ** 2, axis=(0, 1, 3, 4), keepdims=True)
    g = gamma.reshape(1, 1, -1, 1, 1)
    b = beta.reshape(1, 1, -1, 1, 1)
    return (x - mean) / jnp.sqrt(var + eps) * g + b


if __name__ == "__main__":
    key = jax.random.PRNGKey(0)
    k1, k2, k3, k4 = jax.random.split(key, 4)

    # Case 1: module-default affine (gamma=1, beta=0), small LIAF-like shape.
    # Hits the fused single-pass path.
    T, N, C, H, W = 8, 2, 4, 16, 16
    x = jax.random.normal(k1, (T, N, C, H, W), dtype=jnp.float32)
    gamma = jnp.ones((C,), dtype=jnp.float32)
    beta = jnp.zeros((C,), dtype=jnp.float32)
    out = jax.block_until_ready(batch_norm_2d1_forward(x, gamma, beta))
    ref = _reference(x, gamma, beta)
    assert out.shape == (T, N, C, H, W)
    assert float(jnp.max(jnp.abs(out - ref))) < 1e-4

    # Case 2: force the large-tensor two-call path with a tiny budget so the
    # stats pass has a ragged (masked) last tile and the normalize pass runs
    # multiple lane-dense row tiles; non-trivial gamma/beta and a mean offset.
    T2, N2, C2, H2, W2 = 7, 2, 16, 8, 8            # R = 14 (awkward / ragged)
    x2 = jax.random.normal(k2, (T2, N2, C2, H2, W2), dtype=jnp.float32) + 2.0
    gamma2 = jax.random.normal(k3, (C2,), dtype=jnp.float32)
    beta2 = jax.random.normal(k4, (C2,), dtype=jnp.float32)
    out2 = jax.block_until_ready(
        batch_norm_2d1_forward(x2, gamma2, beta2,
                               fuse_threshold_bytes=0,
                               tile_budget_bytes=16 * 1024))
    ref2 = _reference(x2, gamma2, beta2)
    assert out2.shape == (T2, N2, C2, H2, W2)
    assert float(jnp.max(jnp.abs(out2 - ref2))) < 2e-4

    print("KERNEL_OK")
</pallas_src>

<mosaic_0001>
module attributes {stable_mosaic.version = 11 : i64} {
  func.func @_bn_fused_kernel(%arg0: i32, %arg1: memref<16x4x256xf32, #tpu.memory_space<vmem>>, %arg2: memref<4x1xf32, #tpu.memory_space<vmem>>, %arg3: memref<4x1xf32, #tpu.memory_space<vmem>>, %arg4: memref<16x4x256xf32, #tpu.memory_space<vmem>>) attributes {dimension_semantics = [#tpu.dimension_semantics<arbitrary>], iteration_bounds = array<i64: 1>, scalar_prefetch = 0 : i64, scratch_operands = 0 : i64, tpu.core_type = #tpu.core_type<tc>, window_params = [{pipeline_mode = #tpu.pipeline_mode<synchronous>, transform_indices = @transform_0, window_bounds = array<i64: 16, 4, 256>}, {pipeline_mode = #tpu.pipeline_mode<synchronous>, transform_indices = @transform_1, window_bounds = array<i64: 4, 1>}, {pipeline_mode = #tpu.pipeline_mode<synchronous>, transform_indices = @transform_2, window_bounds = array<i64: 4, 1>}, {pipeline_mode = #tpu.pipeline_mode<synchronous>, transform_indices = @transform_3, window_bounds = array<i64: 16, 4, 256>}]} {
    %c0 = arith.constant 0 : index
    %c0_0 = arith.constant 0 : index
    %c0_1 = arith.constant 0 : index
    %0 = vector.load %arg1[%c0, %c0_0, %c0_1] : memref<16x4x256xf32, #tpu.memory_space<vmem>>, vector<16x4x256xf32>
    %cst = arith.constant dense<0.000000e+00> : vector<4x256xf32>
    %1 = vector.multi_reduction <add>, %0, %cst [0] : vector<16x4x256xf32> to vector<4x256xf32>
    %2 = arith.mulf %0, %0 : vector<16x4x256xf32>
    %cst_2 = arith.constant dense<0.000000e+00> : vector<4x256xf32>
    %3 = vector.multi_reduction <add>, %2, %cst_2 [0] : vector<16x4x256xf32> to vector<4x256xf32>
    %cst_3 = arith.constant dense<0.000000e+00> : vector<4xf32>
    %4 = vector.multi_reduction <add>, %1, %cst_3 [1] : vector<4x256xf32> to vector<4xf32>
    %5 = vector.shape_cast %4 : vector<4xf32> to vector<4x1xf32>
    %cst_4 = arith.constant dense<0.000000e+00> : vector<4xf32>
    %6 = vector.multi_reduction <add>, %3, %cst_4 [1] : vector<4x256xf32> to vector<4xf32>
    %7 = vector.shape_cast %6 : vector<4xf32> to vector<4x1xf32>
    %cst_5 = arith.constant 2.44140625E-4 : f32
    %8 = vector.broadcast %cst_5 : f32 to vector<4x1xf32>
    %9 = arith.mulf %5, %8 : vector<4x1xf32>
    %cst_6 = arith.constant 2.44140625E-4 : f32
    %10 = vector.broadcast %cst_6 : f32 to vector<4x1xf32>
    %11 = arith.mulf %7, %10 : vector<4x1xf32>
    %12 = arith.mulf %9, %9 : vector<4x1xf32>
    %13 = arith.subf %11, %12 : vector<4x1xf32>
    %cst_7 = arith.constant 0.000000e+00 : f32
    %14 = vector.broadcast %cst_7 : f32 to vector<4x1xf32>
    %15 = arith.maximumf %13, %14 : vector<4x1xf32>
    %c0_8 = arith.constant 0 : index
    %c0_9 = arith.constant 0 : index
    %16 = vector.load %arg2[%c0_8, %c0_9] : memref<4x1xf32, #tpu.memory_space<vmem>>, vector<4x1xf32>
    %cst_10 = arith.constant 9.99999974E-6 : f32
    %17 = vector.broadcast %cst_10 : f32 to vector<4x1xf32>
    %18 = arith.addf %15, %17 : vector<4x1xf32>
    %19 = math.rsqrt %18 : vector<4x1xf32>
    %20 = arith.mulf %16, %19 : vector<4x1xf32>
    %c0_11 = arith.constant 0 : index
    %c0_12 = arith.constant 0 : index
    %21 = vector.load %arg3[%c0_11, %c0_12] : memref<4x1xf32, #tpu.memory_space<vmem>>, vector<4x1xf32>
    %22 = arith.mulf %9, %20 : vector<4x1xf32>
    %23 = arith.subf %21, %22 : vector<4x1xf32>
    %24 = vector.shape_cast %20 : vector<4x1xf32> to vector<1x4x1xf32>
    %25 = vector.broadcast %24 : vector<1x4x1xf32> to vector<16x4x256xf32>
    %26 = arith.mulf %0, %25 : vector<16x4x256xf32>
    %27 = vector.shape_cast %23 : vector<4x1xf32> to vector<1x4x1xf32>
    %28 = vector.broadcast %27 : vector<1x4x1xf32> to vector<16x4x256xf32>
    %29 = arith.addf %26, %28 : vector<16x4x256xf32>
    %c0_13 = arith.constant 0 : index
    %c0_14 = arith.constant 0 : index
    %c0_15 = arith.constant 0 : index
    %30 = vector.load %arg4[%c0_13, %c0_14, %c0_15] : memref<16x4x256xf32, #tpu.memory_space<vmem>>, vector<16x4x256xf32>
    tpu.vector_store %arg4[%c0_13, %c0_14, %c0_15], %29 {strides = array<i32>} : memref<16x4x256xf32, #tpu.memory_space<vmem>>, vector<16x4x256xf32>,
    return
  }
  func.func @transform_0(%arg0: i32) -> (i32, i32, i32) {
    %c0_i32 = arith.constant 0 : i32
    %c0_i32_0 = arith.constant 0 : i32
    %c0_i32_1 = arith.constant 0 : i32
    %c0_i32_2 = arith.constant 0 : i32
    return %c0_i32, %c0_i32_0, %c0_i32_1 : i32, i32, i32
  }
  func.func @transform_1(%arg0: i32) -> (i32, i32) {
    %c0_i32 = arith.constant 0 : i32
    %c0_i32_0 = arith.constant 0 : i32
    %c0_i32_1 = arith.constant 0 : i32
    return %c0_i32, %c0_i32_0 : i32, i32
  }
  func.func @transform_2(%arg0: i32) -> (i32, i32) {
    %c0_i32 = arith.constant 0 : i32
    %c0_i32_0 = arith.constant 0 : i32
    %c0_i32_1 = arith.constant 0 : i32
    return %c0_i32, %c0_i32_0 : i32, i32
  }
  func.func @transform_3(%arg0: i32) -> (i32, i32, i32) {
    %c0_i32 = arith.constant 0 : i32
    %c0_i32_0 = arith.constant 0 : i32
    %c0_i32_1 = arith.constant 0 : i32
    %c0_i32_2 = arith.constant 0 : i32
    return %c0_i32, %c0_i32_0, %c0_i32_1 : i32, i32, i32
  }
}

</mosaic_0001>

<llo_original>
// kernel: tpu_custom_call.1
$region0: #{tpu_custom_call.1}
  #allocation0 [shape = 'u32[]', space=smem, size = 0x4, offset = 0x4, fixed_abs, tag = 'smem constant byte address 0x4 - core index']
  #allocation1 [shape = 'u32[144,128]{1,0:T(1,128)}', space=vmem, size = 0x12000, scoped, tag = 'internal scratch']
  %s0 = inlined_call_operand.hbm [shape: f32[16,4,256], index: 0, kind: input, shape index: {}]
  %s1 = inlined_call_operand.vmem [shape: f32[4,1], index: 1, kind: input, shape index: {}]
  %s2 = inlined_call_operand.vmem [shape: f32[4,1], index: 2, kind: input, shape index: {}]
  %s3 = inlined_call_operand.hbm [shape: f32[16,4,256], index: 3, kind: output, shape index: {}]
  %s4 = sld [smem:[#allocation0]]
  $region26: #{tpu_custom_call.1} parent=0
    _
  %s6 = ssub.s32 1, %s4
  %s7 = scalar_select 0, %s6, %s4
  $region1: #{tpu_custom_call.1} parent=0
    #allocation2 [shape = 'u8[65536]{0}', space=vmem, size = 0x10000, scoped, tag = 'input window, operand 0, single buffered']
    #allocation3 [shape = 's32[1]{0}', space=sflag, size = 0x4, scoped, tag = 'scoped memory for tpu_custom_call.1']
    #allocation4 [shape = 's32[1]{0}', space=sflag, size = 0x4, scoped, tag = 'scoped memory for tpu_custom_call.1']
    #allocation5 [shape = 'u8[65536]{0}', space=vmem, size = 0x10000, scoped, tag = 'output window, operand 0, single buffered']
    %8 = vsyncpa [#allocation3], 0
    %9 = vsyncpa [#allocation4], 0
    // Predicated region
    $region2: #{tpu_custom_call.1} parent=1 // pred_check
      _
    $region3: #{tpu_custom_call.1} parent=1 // pred_check_branch
      %11 = sbr.rel (0) target = $region5
    $region4: #{tpu_custom_call.1} parent=1 // pred_region
      %s13 = ssub.s32 2048, 2048
      %14 = vsyncadd [#allocation3], %s13
      %s15 = sshll.u32 [#allocation2], 4
      %s16 = int_to_ptr.vmem [resolvable:$true] %s15
      %21 = dma.hbm_to_vmem [thread:$0]  %s0, 2048, %s16, [#allocation3], 128, 128, 8
    $region5: #{tpu_custom_call.1} parent=1 // pred_fallthru
      _
    // Predicated region
    $region6: #{tpu_custom_call.1} parent=1 // pred_check
      _
    $region7: #{tpu_custom_call.1} parent=1 // pred_check_branch
      %23 = sbr.rel (0) target = $region9
    $region8: #{tpu_custom_call.1} parent=1 // pred_region
      _
    $region9: #{tpu_custom_call.1} parent=1 // pred_fallthru
      _
    // Predicated region
    $region10: #{tpu_custom_call.1} parent=1 // pred_check
      _
    $region11: #{tpu_custom_call.1} parent=1 // pred_check_branch
      %25 = sbr.rel (0) target = $region13
    $region12: #{tpu_custom_call.1} parent=1 // pred_region
      _
    $region13: #{tpu_custom_call.1} parent=1 // pred_fallthru
      _
    // Predicated region
    $region14: #{tpu_custom_call.1} parent=1 // pred_check
      _
    $region15: #{tpu_custom_call.1} parent=1 // pred_check_branch
      %27 = sbr.rel (0) target = $region17
    $region16: #{tpu_custom_call.1} parent=1 // pred_region
      %28 = dma.done [#allocation3], 2048
    $region17: #{tpu_custom_call.1} parent=1 // pred_fallthru
      _
    %v29 = vld [vmem:[#allocation2] sm:$0xff]
    %v30 = vld [vmem:[#allocation2 + $0x8] sm:$0xff]
    %v31 = vld [vmem:[#allocation2 + $0x10] sm:$0xff]
    %v32 = vld [vmem:[#allocation2 + $0x18] sm:$0xff]
    %v33 = vld [vmem:[#allocation2 + $0x20] sm:$0xff]
    %v34 = vld [vmem:[#allocation2 + $0x28] sm:$0xff]
    %v35 = vld [vmem:[#allocation2 + $0x30] sm:$0xff]
    %v36 = vld [vmem:[#allocation2 + $0x38] sm:$0xff]
    %v37 = vld [vmem:[#allocation2 + $0x40] sm:$0xff]
    %v38 = vld [vmem:[#allocation2 + $0x48] sm:$0xff]
    %v39 = vld [vmem:[#allocation2 + $0x50] sm:$0xff]
    %v40 = vld [vmem:[#allocation2 + $0x58] sm:$0xff]
    %v41 = vld [vmem:[#allocation2 + $0x60] sm:$0xff]
    %v42 = vld [vmem:[#allocation2 + $0x68] sm:$0xff]
    %v43 = vld [vmem:[#allocation2 + $0x70] sm:$0xff]
    %v44 = vld [vmem:[#allocation2 + $0x78] sm:$0xff]
    %v61 = vcombine.high %v29, %v29
    %v62 = vcombine.high %v30, %v30
    %v63 = vcombine.high %v31, %v31
    %v64 = vcombine.high %v32, %v32
    %v65 = vcombine.high %v33, %v33
    %v66 = vcombine.high %v34, %v34
    %v67 = vcombine.high %v35, %v35
    %v68 = vcombine.high %v36, %v36
    %v69 = vcombine.high %v37, %v37
    %v70 = vcombine.high %v38, %v38
    %v71 = vcombine.high %v39, %v39
    %v72 = vcombine.high %v40, %v40
    %v73 = vcombine.high %v41, %v41
    %v74 = vcombine.high %v42, %v42
    %v75 = vcombine.high %v43, %v43
    %v76 = vcombine.high %v44, %v44
    %vm93 = vcmask 1043456
    %v94 = vsel %vm93, %v29, 0.0
    %v95 = vsel %vm93, %v30, 0.0
    %v96 = vadd.f32 %v94, %v95
    %v97 = vsel %vm93, %v31, 0.0
    %v98 = vadd.f32 %v96, %v97
    %v99 = vsel %vm93, %v32, 0.0
    %v100 = vadd.f32 %v98, %v99
    %v101 = vsel %vm93, %v33, 0.0
    %v102 = vadd.f32 %v100, %v101
    %v103 = vsel %vm93, %v34, 0.0
    %v104 = vadd.f32 %v102, %v103
    %v105 = vsel %vm93, %v35, 0.0
    %v106 = vadd.f32 %v104, %v105
    %v107 = vsel %vm93, %v36, 0.0
    %v108 = vadd.f32 %v106, %v107
    %v109 = vsel %vm93, %v37, 0.0
    %v110 = vadd.f32 %v108, %v109
    %v111 = vsel %vm93, %v38, 0.0
    %v112 = vadd.f32 %v110, %v111
    %v113 = vsel %vm93, %v39, 0.0
    %v114 = vadd.f32 %v112, %v113
    %v115 = vsel %vm93, %v40, 0.0
    %v116 = vadd.f32 %v114, %v115
    %v117 = vsel %vm93, %v41, 0.0
    %v118 = vadd.f32 %v116, %v117
    %v119 = vsel %vm93, %v42, 0.0
    %v120 = vadd.f32 %v118, %v119
    %v121 = vsel %vm93, %v43, 0.0
    %v122 = vadd.f32 %v120, %v121
    %v123 = vsel %vm93, %v44, 0.0
    %v124 = vadd.f32 %v122, %v123
    %v125 = vsel %vm93, %v61, 0.0
    %v126 = vsel %vm93, %v62, 0.0
    %v127 = vadd.f32 %v125, %v126
    %v128 = vsel %vm93, %v63, 0.0
    %v129 = vadd.f32 %v127, %v128
    %v130 = vsel %vm93, %v64, 0.0
    %v131 = vadd.f32 %v129, %v130
    %v132 = vsel %vm93, %v65, 0.0
    %v133 = vadd.f32 %v131, %v132
    %v134 = vsel %vm93, %v66, 0.0
    %v135 = vadd.f32 %v133, %v134
    %v136 = vsel %vm93, %v67, 0.0
    %v137 = vadd.f32 %v135, %v136
    %v138 = vsel %vm93, %v68, 0.0
    %v139 = vadd.f32 %v137, %v138
    %v140 = vsel %vm93, %v69, 0.0
    %v141 = vadd.f32 %v139, %v140
    %v142 = vsel %vm93, %v70, 0.0
    %v143 = vadd.f32 %v141, %v142
    %v144 = vsel %vm93, %v71, 0.0
    %v145 = vadd.f32 %v143, %v144
    %v146 = vsel %vm93, %v72, 0.0
    %v147 = vadd.f32 %v145, %v146
    %v148 = vsel %vm93, %v73, 0.0
    %v149 = vadd.f32 %v147, %v148
    %v150 = vsel %vm93, %v74, 0.0
    %v151 = vadd.f32 %v149, %v150
    %v152 = vsel %vm93, %v75, 0.0
    %v153 = vadd.f32 %v151, %v152
    %v154 = vsel %vm93, %v76, 0.0
    %v155 = vadd.f32 %v153, %v154
    %v156 = vmul.f32 %v29, %v29
    %v157 = vmul.f32 %v30, %v30
    %v158 = vmul.f32 %v31, %v31
    %v159 = vmul.f32 %v32, %v32
    %v160 = vmul.f32 %v33, %v33
    %v161 = vmul.f32 %v34, %v34
    %v162 = vmul.f32 %v35, %v35
    %v163 = vmul.f32 %v36, %v36
    %v164 = vmul.f32 %v37, %v37
    %v165 = vmul.f32 %v38, %v38
    %v166 = vmul.f32 %v39, %v39
    %v167 = vmul.f32 %v40, %v40
    %v168 = vmul.f32 %v41, %v41
    %v169 = vmul.f32 %v42, %v42
    %v170 = vmul.f32 %v43, %v43
    %v171 = vmul.f32 %v44, %v44
    %v188 = vcombine.high %v156, %v156
    %v189 = vcombine.high %v157, %v157
    %v190 = vcombine.high %v158, %v158
    %v191 = vcombine.high %v159, %v159
    %v192 = vcombine.high %v160, %v160
    %v193 = vcombine.high %v161, %v161
    %v194 = vcombine.high %v162, %v162
    %v195 = vcombine.high %v163, %v163
    %v196 = vcombine.high %v164, %v164
    %v197 = vcombine.high %v165, %v165
    %v198 = vcombine.high %v166, %v166
    %v199 = vcombine.high %v167, %v167
    %v200 = vcombine.high %v168, %v168
    %v201 = vcombine.high %v169, %v169
    %v202 = vcombine.high %v170, %v170
    %v203 = vcombine.high %v171, %v171
    %v220 = vsel %vm93, %v156, 0.0
    %v221 = vsel %vm93, %v157, 0.0
    %v222 = vadd.f32 %v220, %v221
    %v223 = vsel %vm93, %v158, 0.0
    %v224 = vadd.f32 %v222, %v223
    %v225 = vsel %vm93, %v159, 0.0
    %v226 = vadd.f32 %v224, %v225
    %v227 = vsel %vm93, %v160, 0.0
    %v228 = vadd.f32 %v226, %v227
    %v229 = vsel %vm93, %v161, 0.0
    %v230 = vadd.f32 %v228, %v229
    %v231 = vsel %vm93, %v162, 0.0
    %v232 = vadd.f32 %v230, %v231
    %v233 = vsel %vm93, %v163, 0.0
    %v234 = vadd.f32 %v232, %v233
    %v235 = vsel %vm93, %v164, 0.0
    %v236 = vadd.f32 %v234, %v235
    %v237 = vsel %vm93, %v165, 0.0
    %v238 = vadd.f32 %v236, %v237
    %v239 = vsel %vm93, %v166, 0.0
    %v240 = vadd.f32 %v238, %v239
    %v241 = vsel %vm93, %v167, 0.0
    %v242 = vadd.f32 %v240, %v241
    %v243 = vsel %vm93, %v168, 0.0
    %v244 = vadd.f32 %v242, %v243
    %v245 = vsel %vm93, %v169, 0.0
    %v246 = vadd.f32 %v244, %v245
    %v247 = vsel %vm93, %v170, 0.0
    %v248 = vadd.f32 %v246, %v247
    %v249 = vsel %vm93, %v171, 0.0
    %v250 = vadd.f32 %v248, %v249
    %v251 = vsel %vm93, %v188, 0.0
    %v252 = vsel %vm93, %v189, 0.0
    %v253 = vadd.f32 %v251, %v252
    %v254 = vsel %vm93, %v190, 0.0
    %v255 = vadd.f32 %v253, %v254
    %v256 = vsel %vm93, %v191, 0.0
    %v257 = vadd.f32 %v255, %v256
    %v258 = vsel %vm93, %v192, 0.0
    %v259 = vadd.f32 %v257, %v258
    %v260 = vsel %vm93, %v193, 0.0
    %v261 = vadd.f32 %v259, %v260
    %v262 = vsel %vm93, %v194, 0.0
    %v263 = vadd.f32 %v261, %v262
    %v264 = vsel %vm93, %v195, 0.0
    %v265 = vadd.f32 %v263, %v264
    %v266 = vsel %vm93, %v196, 0.0
    %v267 = vadd.f32 %v265, %v266
    %v268 = vsel %vm93, %v197, 0.0
    %v269 = vadd.f32 %v267, %v268
    %v270 = vsel %vm93, %v198, 0.0
    %v271 = vadd.f32 %v269, %v270
    %v272 = vsel %vm93, %v199, 0.0
    %v273 = vadd.f32 %v271, %v272
    %v274 = vsel %vm93, %v200, 0.0
    %v275 = vadd.f32 %v273, %v274
    %v276 = vsel %vm93, %v201, 0.0
    %v277 = vadd.f32 %v275, %v276
    %v278 = vsel %vm93, %v202, 0.0
    %v279 = vadd.f32 %v277, %v278
    %v280 = vsel %vm93, %v203, 0.0
    %v281 = vadd.f32 %v279, %v280
    %v282 = vsel %vm93, %v124, 0.0
    %v283 = vsel %vm93, %v155, 0.0
    %v284 = vadd.f32 %v282, %v283
    %285 = vadd.xlane.f32.xlu0 %v284
    %v286 = vpop.xlane.xlu0 %285
    %v287 = vsel %vm93, %v250, 0.0
    %v288 = vsel %vm93, %v281, 0.0
    %v289 = vadd.f32 %v287, %v288
    %290 = vadd.xlane.f32.xlu0 %v289
    %v291 = vpop.xlane.xlu0 %290
    %v292 = vmul.f32 %v286, 0.00024414063
    %v293 = vmul.f32 %v291, 0.00024414063
    %v294 = vmul.f32 %v292, %v292
    %v295 = vsub.f32 %v293, %v294
    %v296 = vmax.f32 %v295, 0.0
    %v297 = vld [vmem:[%s1] sm:$0xf]
    %v298 = vadd.f32 %v296, 1e-05
    %v299 = vrsqrt.pop %v298
    %v300 = vmul.f32 %v297, %v299
    %v301 = vld [vmem:[%s2] sm:$0xf]
    %v302 = vmul.f32 %v292, %v300
    %v303 = vsub.f32 %v301, %v302
    %305 = vset.pattern.permute.xlu0 0
    %306 = vperm.xlu0 %305, %v300
    %v307 = vpop.permute.xlu0 %306
    %v309 = vunpack.c.l.s4 839922192
    %v310 = vunpack.c.0.s8 %v309
    %v311 = vlaneseq
    %v312 = vshrl.u32 %v311, 7
    %v313 = vsub.s32 %v310, %v312
    %v314 = vrot.slane %v307, %v313
    %v316 = vmul.f32 %v29, %v314
    %v317 = vmul.f32 %v30, %v314
    %v318 = vmul.f32 %v31, %v314
    %v319 = vmul.f32 %v32, %v314
    %v320 = vmul.f32 %v33, %v314
    %v321 = vmul.f32 %v34, %v314
    %v322 = vmul.f32 %v35, %v314
    %v323 = vmul.f32 %v36, %v314
    %v324 = vmul.f32 %v37, %v314
    %v325 = vmul.f32 %v38, %v314
    %v326 = vmul.f32 %v39, %v314
    %v327 = vmul.f32 %v40, %v314
    %v328 = vmul.f32 %v41, %v314
    %v329 = vmul.f32 %v42, %v314
    %v330 = vmul.f32 %v43, %v314
    %v331 = vmul.f32 %v44, %v314
    %333 = vset.pattern.permute.xlu0 0
    %334 = vperm.xlu0 %333, %v303
    %v335 = vpop.permute.xlu0 %334
    %v337 = vunpack.c.l.s4 839922192
    %v338 = vunpack.c.0.s8 %v337
    %v339 = vlaneseq
    %v340 = vshrl.u32 %v339, 7
    %v341 = vsub.s32 %v338, %v340
    %v342 = vrot.slane %v335, %v341
    %v344 = vadd.f32 %v316, %v342
    %v345 = vadd.f32 %v317, %v342
    %v346 = vadd.f32 %v318, %v342
    %v347 = vadd.f32 %v319, %v342
    %v348 = vadd.f32 %v320, %v342
    %v349 = vadd.f32 %v321, %v342
    %v350 = vadd.f32 %v322, %v342
    %v351 = vadd.f32 %v323, %v342
    %v352 = vadd.f32 %v324, %v342
    %v353 = vadd.f32 %v325, %v342
    %v354 = vadd.f32 %v326, %v342
    %v355 = vadd.f32 %v327, %v342
    %v356 = vadd.f32 %v328, %v342
    %v357 = vadd.f32 %v329, %v342
    %v358 = vadd.f32 %v330, %v342
    %v359 = vadd.f32 %v331, %v342
    %360 = vst [vmem:[#allocation5] sm:$0xff] %v344
    %361 = vst [vmem:[#allocation5 + $0x8] sm:$0xff] %v345
    %362 = vst [vmem:[#allocation5 + $0x10] sm:$0xff] %v346
    %363 = vst [vmem:[#allocation5 + $0x18] sm:$0xff] %v347
    %364 = vst [vmem:[#allocation5 + $0x20] sm:$0xff] %v348
    %365 = vst [vmem:[#allocation5 + $0x28] sm:$0xff] %v349
    %366 = vst [vmem:[#allocation5 + $0x30] sm:$0xff] %v350
    %367 = vst [vmem:[#allocation5 + $0x38] sm:$0xff] %v351
    %368 = vst [vmem:[#allocation5 + $0x40] sm:$0xff] %v352
    %369 = vst [vmem:[#allocation5 + $0x48] sm:$0xff] %v353
    %370 = vst [vmem:[#allocation5 + $0x50] sm:$0xff] %v354
    %371 = vst [vmem:[#allocation5 + $0x58] sm:$0xff] %v355
    %372 = vst [vmem:[#allocation5 + $0x60] sm:$0xff] %v356
    %373 = vst [vmem:[#allocation5 + $0x68] sm:$0xff] %v357
    %374 = vst [vmem:[#allocation5 + $0x70] sm:$0xff] %v358
    %375 = vst [vmem:[#allocation5 + $0x78] sm:$0xff] %v359
    // Predicated region
    $region18: #{tpu_custom_call.1} parent=1 // pred_check
      _
    $region19: #{tpu_custom_call.1} parent=1 // pred_check_branch
      %377 = sbr.rel (0) target = $region21
    $region20: #{tpu_custom_call.1} parent=1 // pred_region
      %s379 = ssub.s32 2048, 2048
      %380 = vsyncadd [#allocation4], %s379
      %s381 = sshll.u32 [#allocation5], 4
      %s382 = int_to_ptr.vmem [resolvable:$true] %s381
      %387 = dma.vmem_to_hbm [thread:$0]  %s382, 2048, %s3, [#allocation4], 128, 128, 8
    $region21: #{tpu_custom_call.1} parent=1 // pred_fallthru
      _
    // Predicated region
    $region22: #{tpu_custom_call.1} parent=1 // pred_check
      _
    $region23: #{tpu_custom_call.1} parent=1 // pred_check_branch
      %389 = sbr.rel (0) target = $region25
    $region24: #{tpu_custom_call.1} parent=1 // pred_region
      %390 = dma.done [#allocation4], 2048
    $region25: #{tpu_custom_call.1} parent=1 // pred_fallthru
      _
    %391 = vsyncpa [#allocation3], 1
    %392 = vsyncpa [#allocation4], 1

</llo_original>
